<compile_context>
chip_gen: v6e
topology: v6e:2x2x1
jax: 0.10.0
libtpu: 0.0.40
codegen_flags: <defaults>
</compile_context>

<pallas_src>
import jax
import jax.numpy as jnp
from jax import lax
from jax.experimental import pallas as pl
from jax.experimental.pallas import tpu as pltpu

EPS = 1e-5


# ---------------------------------------------------------------------------
# Fused kernel: complex LayerNorm + single pre-composed complex matmul.
#   xr, xi            : (tm, C)   fp32 real / imag planes of the input rows
#   gr, gi, br, bi    : (1, C)    fp32 complex LayerNorm affine
#   w                 : (2C, 2K)  bf16 real block weight [[Wr, Wi], [-Wi, Wr]]
#   y                 : (tm, 2K)  fp32 output, [real | imag] on the lane axis
# ---------------------------------------------------------------------------
def _ln_fused_matmul_kernel(xr_ref, xi_ref, gr_ref, gi_ref, br_ref, bi_ref,
                            w_ref, y_ref):
    xr = xr_ref[...]
    xi = xi_ref[...]

    # Complex LayerNorm statistics in fp32 (VPU/EUP path).
    mu_r = jnp.mean(xr, axis=-1, keepdims=True)
    mu_i = jnp.mean(xi, axis=-1, keepdims=True)
    cr = xr - mu_r
    ci = xi - mu_i
    var = jnp.mean(cr * cr + ci * ci, axis=-1, keepdims=True)
    inv = lax.rsqrt(var + EPS)
    nr = cr * inv
    ni = ci * inv

    gr = gr_ref[...]
    gi = gi_ref[...]
    # complex affine: (gr + i*gi) * (nr + i*ni) + (br + i*bi)
    ar = gr * nr - gi * ni + br_ref[...]
    ai = gr * ni + gi * nr + bi_ref[...]

    # One stacked block matmul on the MXU (bf16 inputs, fp32 accumulation):
    #   [ar | ai] @ [[Wr, Wi], [-Wi, Wr]] = [yr | yi]
    a = jnp.concatenate([ar, ai], axis=-1).astype(jnp.bfloat16)
    y_ref[...] = jnp.dot(a, w_ref[...], preferred_element_type=jnp.float32)


def _ln_fused_matmul(xr, xi, gr, gi, br, bi, wblk, *, tm):
    n, c = xr.shape
    two_k = wblk.shape[1]
    row = lambda i: (i, 0)
    const = lambda i: (0, 0)
    return pl.pallas_call(
        _ln_fused_matmul_kernel,
        out_shape=jax.ShapeDtypeStruct((n, two_k), jnp.float32),
        grid_spec=pltpu.PrefetchScalarGridSpec(
            num_scalar_prefetch=0,
            grid=(n // tm,),
            in_specs=[
                pl.BlockSpec((tm, c), row),
                pl.BlockSpec((tm, c), row),
                pl.BlockSpec((1, c), const),
                pl.BlockSpec((1, c), const),
                pl.BlockSpec((1, c), const),
                pl.BlockSpec((1, c), const),
                pl.BlockSpec(wblk.shape, const),   # stays VMEM-resident
            ],
            out_specs=pl.BlockSpec((tm, two_k), row),
        ),
        compiler_params=pltpu.CompilerParams(
            dimension_semantics=("parallel",)),
    )(xr, xi, gr, gi, br, bi, wblk)


# ---------------------------------------------------------------------------
# Tile-size selection / padding helpers
# ---------------------------------------------------------------------------
def _round_up(x, m):
    return -(-x // m) * m


def _choose_tm(n, cap=512):
    """Large row tiles, multiple of 8, with >=2 grid steps when possible."""
    if n >= 2 * cap:
        return cap
    half = _round_up(max(n // 2, 1), 8)
    if 0 < half < n:
        return half
    return _round_up(n, 8)


# ---------------------------------------------------------------------------
# Full module forward
# ---------------------------------------------------------------------------
def complex_patch_expanding(x, params, *, scale_factor=2):
    """x: complex64 (B, H, W, Cin) -> complex64 (B, s*H, s*W, Cout)."""
    b, h, w, c = x.shape
    s = scale_factor
    n = b * h * w

    xr = jnp.real(x).astype(jnp.float32).reshape(n, c)
    xi = jnp.imag(x).astype(jnp.float32).reshape(n, c)

    # ---- Pre-compose expand and lin into one complex weight (wrapper/XLA) --
    # expand_w: (s^2*C, C) torch layout; lin_w: (out, C) torch layout.
    out_ch = params["lin_w"].shape[0]
    we = jnp.transpose(params["expand_w"]).reshape(c, s * s, c)  # (cin, q, cm)
    wl = jnp.transpose(params["lin_w"])                          # (cm, out)
    wf = jnp.einsum("iqc,co->iqo", we, wl).reshape(c, s * s * out_ch)
    k = s * s * out_ch
    wfr = jnp.real(wf).astype(jnp.float32)
    wfi = jnp.imag(wf).astype(jnp.float32)
    # Real block weight for one stacked matmul: [ar|ai] @ [[Wr,Wi],[-Wi,Wr]].
    wblk = jnp.concatenate(
        [jnp.concatenate([wfr, wfi], axis=1),
         jnp.concatenate([-wfi, wfr], axis=1)], axis=0).astype(jnp.bfloat16)

    gr = params["gamma_r"].reshape(1, c).astype(jnp.float32)
    gi = params["gamma_i"].reshape(1, c).astype(jnp.float32)
    br = params["beta_r"].reshape(1, c).astype(jnp.float32)
    bi = params["beta_i"].reshape(1, c).astype(jnp.float32)

    # ---- Row tiling (zero-pad ragged row counts instead of asserting) ------
    tm = _choose_tm(n)
    n_pad = _round_up(n, tm)
    if n_pad != n:
        pad = n_pad - n
        xr = jnp.pad(xr, ((0, pad), (0, 0)))
        xi = jnp.pad(xi, ((0, pad), (0, 0)))

    y = _ln_fused_matmul(xr, xi, gr, gi, br, bi, wblk, tm=tm)
    y = y[:n]                                   # drop padded rows
    z = lax.complex(y[:, :k], y[:, k:])         # (n, s*s*out) complex64

    # rearrange 'b h w (s_h s_w c) -> b (h s_h) (w s_w) c'  (layout glue)
    z = z.reshape(b, h, w, s, s, out_ch)
    z = jnp.transpose(z, (0, 1, 3, 2, 4, 5))
    return z.reshape(b, h * s, w * s, out_ch)


# ---------------------------------------------------------------------------
# Pure-JAX reference (original op sequence, complex64) for verification.
# ---------------------------------------------------------------------------
def reference(x, params, *, scale_factor=2):
    b, h, w, c = x.shape
    s = scale_factor
    xf = x.reshape(b, -1, c).astype(jnp.complex64)
    mu = jnp.mean(xf, axis=-1, keepdims=True)
    d = xf - mu
    var = jnp.mean(jnp.abs(d) ** 2, axis=-1, keepdims=True)
    xn = d / jnp.sqrt(var + EPS)
    gamma = lax.complex(params["gamma_r"], params["gamma_i"])
    beta = lax.complex(params["beta_r"], params["beta_i"])
    xf = gamma * xn + beta
    xf = xf @ jnp.transpose(params["expand_w"])          # (b, hw, s*s*c)
    xf = xf.reshape(b, h, w, s, s, c)
    xf = jnp.transpose(xf, (0, 1, 3, 2, 4, 5)).reshape(b, h * s, w * s, c)
    out_ch = params["lin_w"].shape[0]
    xf = xf.reshape(b, -1, c) @ jnp.transpose(params["lin_w"])
    return xf.reshape(b, h * s, w * s, out_ch)


if __name__ == "__main__":
    in_channels = 32
    out_channels = 16
    scale_factor = 2
    B, H, W = 2, 8, 8

    key = jax.random.PRNGKey(0)
    keys = jax.random.split(key, 8)

    # Input (complex64).
    xr0 = jax.random.normal(keys[0], (B, H, W, in_channels), jnp.float32)
    xi0 = jax.random.normal(keys[1], (B, H, W, in_channels), jnp.float32)
    x = lax.complex(xr0, xi0)

    k_expand = scale_factor ** 2 * in_channels

    def cweight(kr, ki, shape, scale):
        return lax.complex(
            scale * jax.random.normal(kr, shape, jnp.float32),
            scale * jax.random.normal(ki, shape, jnp.float32))

    # Deterministic synthetic parameters (torch-style (out, in) weights).
    params = {
        "gamma_r": 1.0 + 0.1 * jax.random.normal(
            keys[2], (in_channels,), jnp.float32),
        "gamma_i": 0.1 * jax.random.normal(
            keys[3], (in_channels,), jnp.float32),
        "beta_r": 0.05 * jnp.arange(in_channels, dtype=jnp.float32)
                  / in_channels,
        "beta_i": -0.05 * jnp.arange(in_channels, dtype=jnp.float32)
                  / in_channels,
        "expand_w": cweight(keys[4], keys[5], (k_expand, in_channels), 0.05),
        "lin_w": cweight(keys[6], keys[7], (out_channels, in_channels), 0.1),
    }

    out = complex_patch_expanding(x, params, scale_factor=scale_factor)
    out = jax.block_until_ready(out)

    ref = reference(x, params, scale_factor=scale_factor)
    assert out.shape == (B, H * scale_factor, W * scale_factor, out_channels)
    assert out.dtype == jnp.complex64
    # bf16 matmul inputs (fp32 accumulation) => loosened tolerance vs fp32 ref.
    max_err = float(jnp.max(jnp.abs(out - ref)))
    assert max_err < 2e-2, f"max abs err {max_err}"

    print("KERNEL_OK")
</pallas_src>

<mosaic_0001>
module attributes {stable_mosaic.version = 11 : i64} {
  func.func @_ln_fused_matmul_kernel(%arg0: i32, %arg1: memref<64x32xf32, #tpu.memory_space<vmem>>, %arg2: memref<64x32xf32, #tpu.memory_space<vmem>>, %arg3: memref<1x32xf32, #tpu.memory_space<vmem>>, %arg4: memref<1x32xf32, #tpu.memory_space<vmem>>, %arg5: memref<1x32xf32, #tpu.memory_space<vmem>>, %arg6: memref<1x32xf32, #tpu.memory_space<vmem>>, %arg7: memref<64x128xbf16, #tpu.memory_space<vmem>>, %arg8: memref<64x128xf32, #tpu.memory_space<vmem>>) attributes {dimension_semantics = [#tpu.dimension_semantics<parallel>], iteration_bounds = array<i64: 2>, scalar_prefetch = 0 : i64, scratch_operands = 0 : i64, tpu.core_type = #tpu.core_type<tc>, window_params = [{transform_indices = @transform_0, window_bounds = array<i64: 64, 32>}, {transform_indices = @transform_1, window_bounds = array<i64: 64, 32>}, {pipeline_mode = #tpu.pipeline_mode<synchronous>, transform_indices = @transform_2, window_bounds = array<i64: 1, 32>}, {pipeline_mode = #tpu.pipeline_mode<synchronous>, transform_indices = @transform_3, window_bounds = array<i64: 1, 32>}, {pipeline_mode = #tpu.pipeline_mode<synchronous>, transform_indices = @transform_4, window_bounds = array<i64: 1, 32>}, {pipeline_mode = #tpu.pipeline_mode<synchronous>, transform_indices = @transform_5, window_bounds = array<i64: 1, 32>}, {pipeline_mode = #tpu.pipeline_mode<synchronous>, transform_indices = @transform_6, window_bounds = array<i64: 64, 128>}, {transform_indices = @transform_7, window_bounds = array<i64: 64, 128>}]} {
    %c0 = arith.constant 0 : index
    %c0_0 = arith.constant 0 : index
    %0 = vector.load %arg1[%c0, %c0_0] : memref<64x32xf32, #tpu.memory_space<vmem>>, vector<64x32xf32>
    %c0_1 = arith.constant 0 : index
    %c0_2 = arith.constant 0 : index
    %1 = vector.load %arg2[%c0_1, %c0_2] : memref<64x32xf32, #tpu.memory_space<vmem>>, vector<64x32xf32>
    %cst = arith.constant dense<0.000000e+00> : vector<64xf32>
    %2 = vector.multi_reduction <add>, %0, %cst [1] : vector<64x32xf32> to vector<64xf32>
    %3 = vector.shape_cast %2 : vector<64xf32> to vector<64x1xf32>
    %cst_3 = arith.constant 3.200000e+01 : f32
    %4 = vector.broadcast %cst_3 : f32 to vector<64x1xf32>
    %5 = arith.divf %3, %4 : vector<64x1xf32>
    %cst_4 = arith.constant dense<0.000000e+00> : vector<64xf32>
    %6 = vector.multi_reduction <add>, %1, %cst_4 [1] : vector<64x32xf32> to vector<64xf32>
    %7 = vector.shape_cast %6 : vector<64xf32> to vector<64x1xf32>
    %cst_5 = arith.constant 3.200000e+01 : f32
    %8 = vector.broadcast %cst_5 : f32 to vector<64x1xf32>
    %9 = arith.divf %7, %8 : vector<64x1xf32>
    %10 = vector.broadcast %5 : vector<64x1xf32> to vector<64x32xf32>
    %11 = arith.subf %0, %10 : vector<64x32xf32>
    %12 = vector.broadcast %9 : vector<64x1xf32> to vector<64x32xf32>
    %13 = arith.subf %1, %12 : vector<64x32xf32>
    %14 = arith.mulf %11, %11 : vector<64x32xf32>
    %15 = arith.mulf %13, %13 : vector<64x32xf32>
    %16 = arith.addf %14, %15 : vector<64x32xf32>
    %cst_6 = arith.constant dense<0.000000e+00> : vector<64xf32>
    %17 = vector.multi_reduction <add>, %16, %cst_6 [1] : vector<64x32xf32> to vector<64xf32>
    %18 = vector.shape_cast %17 : vector<64xf32> to vector<64x1xf32>
    %cst_7 = arith.constant 3.200000e+01 : f32
    %19 = vector.broadcast %cst_7 : f32 to vector<64x1xf32>
    %20 = arith.divf %18, %19 : vector<64x1xf32>
    %cst_8 = arith.constant 9.99999974E-6 : f32
    %21 = vector.broadcast %cst_8 : f32 to vector<64x1xf32>
    %22 = arith.addf %20, %21 : vector<64x1xf32>
    %23 = math.rsqrt %22 : vector<64x1xf32>
    %24 = vector.broadcast %23 : vector<64x1xf32> to vector<64x32xf32>
    %25 = arith.mulf %11, %24 : vector<64x32xf32>
    %26 = vector.broadcast %23 : vector<64x1xf32> to vector<64x32xf32>
    %27 = arith.mulf %13, %26 : vector<64x32xf32>
    %c0_9 = arith.constant 0 : index
    %c0_10 = arith.constant 0 : index
    %28 = vector.load %arg3[%c0_9, %c0_10] : memref<1x32xf32, #tpu.memory_space<vmem>>, vector<1x32xf32>
    %c0_11 = arith.constant 0 : index
    %c0_12 = arith.constant 0 : index
    %29 = vector.load %arg4[%c0_11, %c0_12] : memref<1x32xf32, #tpu.memory_space<vmem>>, vector<1x32xf32>
    %30 = vector.broadcast %28 : vector<1x32xf32> to vector<64x32xf32>
    %31 = arith.mulf %30, %25 : vector<64x32xf32>
    %32 = vector.broadcast %29 : vector<1x32xf32> to vector<64x32xf32>
    %33 = arith.mulf %32, %27 : vector<64x32xf32>
    %34 = arith.subf %31, %33 : vector<64x32xf32>
    %c0_13 = arith.constant 0 : index
    %c0_14 = arith.constant 0 : index
    %35 = vector.load %arg5[%c0_13, %c0_14] : memref<1x32xf32, #tpu.memory_space<vmem>>, vector<1x32xf32>
    %36 = vector.broadcast %35 : vector<1x32xf32> to vector<64x32xf32>
    %37 = arith.addf %34, %36 : vector<64x32xf32>
    %38 = vector.broadcast %28 : vector<1x32xf32> to vector<64x32xf32>
    %39 = arith.mulf %38, %27 : vector<64x32xf32>
    %40 = vector.broadcast %29 : vector<1x32xf32> to vector<64x32xf32>
    %41 = arith.mulf %40, %25 : vector<64x32xf32>
    %42 = arith.addf %39, %41 : vector<64x32xf32>
    %c0_15 = arith.constant 0 : index
    %c0_16 = arith.constant 0 : index
    %43 = vector.load %arg6[%c0_15, %c0_16] : memref<1x32xf32, #tpu.memory_space<vmem>>, vector<1x32xf32>
    %44 = vector.broadcast %43 : vector<1x32xf32> to vector<64x32xf32>
    %45 = arith.addf %42, %44 : vector<64x32xf32>
    %46 = tpu.concatenate %37, %45 in 1 : vector<64x32xf32>, vector<64x32xf32> -> vector<64x64xf32>
    %47 = arith.truncf %46 : vector<64x64xf32> to vector<64x64xbf16>
    %c0_17 = arith.constant 0 : index
    %c0_18 = arith.constant 0 : index
    %48 = vector.load %arg7[%c0_17, %c0_18] : memref<64x128xbf16, #tpu.memory_space<vmem>>, vector<64x128xbf16>
    %cst_19 = arith.constant dense<0.000000e+00> : vector<64x128xf32>
    %49 = tpu.matmul %47, %48, %cst_19 {dimension_numbers = #tpu.dot_dimension_numbers<[1], [0], [0], [1], [0, 0, 1, 1], [], []>} : vector<64x64xbf16>, vector<64x128xbf16>, vector<64x128xf32> -> vector<64x128xf32>
    %c0_20 = arith.constant 0 : index
    %c0_21 = arith.constant 0 : index
    %50 = vector.load %arg8[%c0_20, %c0_21] : memref<64x128xf32, #tpu.memory_space<vmem>>, vector<64x128xf32>
    tpu.vector_store %arg8[%c0_20, %c0_21], %49 {strides = array<i32>} : memref<64x128xf32, #tpu.memory_space<vmem>>, vector<64x128xf32>,
    return
  }
  func.func @transform_0(%arg0: i32) -> (i32, i32) {
    %c0_i32 = arith.constant 0 : i32
    %c0_i32_0 = arith.constant 0 : i32
    return %arg0, %c0_i32 : i32, i32
  }
  func.func @transform_1(%arg0: i32) -> (i32, i32) {
    %c0_i32 = arith.constant 0 : i32
    %c0_i32_0 = arith.constant 0 : i32
    return %arg0, %c0_i32 : i32, i32
  }
  func.func @transform_2(%arg0: i32) -> (i32, i32) {
    %c0_i32 = arith.constant 0 : i32
    %c0_i32_0 = arith.constant 0 : i32
    %c0_i32_1 = arith.constant 0 : i32
    return %c0_i32, %c0_i32_0 : i32, i32
  }
  func.func @transform_3(%arg0: i32) -> (i32, i32) {
    %c0_i32 = arith.constant 0 : i32
    %c0_i32_0 = arith.constant 0 : i32
    %c0_i32_1 = arith.constant 0 : i32
    return %c0_i32, %c0_i32_0 : i32, i32
  }
  func.func @transform_4(%arg0: i32) -> (i32, i32) {
    %c0_i32 = arith.constant 0 : i32
    %c0_i32_0 = arith.constant 0 : i32
    %c0_i32_1 = arith.constant 0 : i32
    return %c0_i32, %c0_i32_0 : i32, i32
  }
  func.func @transform_5(%arg0: i32) -> (i32, i32) {
    %c0_i32 = arith.constant 0 : i32
    %c0_i32_0 = arith.constant 0 : i32
    %c0_i32_1 = arith.constant 0 : i32
    return %c0_i32, %c0_i32_0 : i32, i32
  }
  func.func @transform_6(%arg0: i32) -> (i32, i32) {
    %c0_i32 = arith.constant 0 : i32
    %c0_i32_0 = arith.constant 0 : i32
    %c0_i32_1 = arith.constant 0 : i32
    return %c0_i32, %c0_i32_0 : i32, i32
  }
  func.func @transform_7(%arg0: i32) -> (i32, i32) {
    %c0_i32 = arith.constant 0 : i32
    %c0_i32_0 = arith.constant 0 : i32
    return %arg0, %c0_i32 : i32, i32
  }
}

</mosaic_0001>

<llo_original>
// kernel: tpu_custom_call.1
$region0: #{tpu_custom_call.1}
  #allocation0 [shape = 'u32[]', space=smem, size = 0x4, offset = 0x4, fixed_abs, tag = 'smem constant byte address 0x4 - core index']
  #allocation1 [shape = 'u32[144,128]{1,0:T(1,128)}', space=vmem, size = 0x12000, scoped, tag = 'internal scratch']
  %s0 = inlined_call_operand.vmem [shape: f32[128,32], index: 0, kind: input, shape index: {}]
  %s1 = inlined_call_operand.vmem [shape: f32[128,32], index: 1, kind: input, shape index: {}]
  %s2 = inlined_call_operand.vmem [shape: f32[1,32], index: 2, kind: input, shape index: {}]
  %s3 = inlined_call_operand.vmem [shape: f32[1,32], index: 3, kind: input, shape index: {}]
  %s4 = inlined_call_operand.vmem [shape: f32[1,32], index: 4, kind: input, shape index: {}]
  %s5 = inlined_call_operand.vmem [shape: f32[1,32], index: 5, kind: input, shape index: {}]
  %s6 = inlined_call_operand.vmem [shape: bf16[64,128], index: 6, kind: input, shape index: {}]
  %s7 = inlined_call_operand.hbm [shape: f32[128,128], index: 7, kind: output, shape index: {}]
  %s8 = sld [smem:[#allocation0]]
  $region61: #{tpu_custom_call.1} parent=0
    _
  %s10 = ssub.s32 1, %s8
  %s11 = scalar_select 0, %s10, %s8
  $region1: #{tpu_custom_call.1} parent=0
    #allocation2 [shape = 'u8[65536]{0}', space=vmem, size = 0x10000, scoped, tag = 'output window, operand 0']
    #allocation3 [shape = 's32[2]{0}', space=sflag, size = 0x8, scoped, tag = 'scoped memory for tpu_custom_call.1']
    %12 = vsyncpa [#allocation3], 0
    %s13 = scalar_lea.sflag [#allocation3], 1
    %14 = vsyncpa %s13, 0
    loop: start=0, step=1, limit=4
    $region2: #{tpu_custom_call.1} parent=1 // loop_pre_header
      _
    $region3: #{tpu_custom_call.1} parent=1 // loop_header
      %s16 = sphi 0, %s20
      %p17 = scmp.ge.s32.totalorder %s16, 4
      %s26 = sphi 0, %s28
      %s29 = sphi 0, %s26
      %s30 = sphi 0, %s29
      %s46 = sphi 0, %s30
      %s52 = sphi 0, %s54
      %s55 = sphi 0, %s52
      %s56 = sphi 0, %s55
      %s72 = sphi 0, %s56
      %s76 = sphi 0, %s76
      %s78 = sphi 0, %s76
      %s79 = sphi 0, %s78
      %s93 = sphi 0, %s79
      %s97 = sphi 0, %s97
      %s99 = sphi 0, %s97
      %s100 = sphi 0, %s99
      %s114 = sphi 0, %s100
      %s118 = sphi 0, %s118
      %s120 = sphi 0, %s118
      %s121 = sphi 0, %s120
      %s135 = sphi 0, %s121
      %s139 = sphi 0, %s139
      %s141 = sphi 0, %s139
      %s142 = sphi 0, %s141
      %s156 = sphi 0, %s142
      %s160 = sphi 0, %s160
      %s162 = sphi 0, %s160
      %s163 = sphi 0, %s162
      %s177 = sphi 0, %s163
      %s183 = sphi 0, %s185
      %s186 = sphi 0, %s183
      %s187 = sphi 0, %s186
      %s203 = sphi 0, %s187
    $region4: #{tpu_custom_call.1} parent=1 // loop_header_branch
      %19 = sbr.rel (%p17) target = $region8
    $region5: #{tpu_custom_call.1} parent=1 // loop_body
      %s21 = ssub.s32 %s16, 1
      %s22 = ssub.s32 %s16, 2
      %s23 = sadd.s32 %s16, 1
      %s24 = ssub.s32 %s16, %s23
      %p25 = scmp.eq.s32.totalorder %s24, 0
      %s27 = sadd.s32 %s26, 1
      %s28 = scalar_select %p25, %s26, %s27
      %p31 = pneg %p25
      %p32 = scmp.eq.s32.totalorder %s16, 1
      %p33 = por %p31, %p32
      %p34 = scmp.ne.s32.totalorder %s26, %s29
      %p35 = scmp.eq.s32.totalorder %s16, 0
      %p36 = por %p34, %p35
      %p37 = scmp.ne.s32.totalorder %s26, %s29
      %p38 = scmp.eq.s32.totalorder %s21, 1
      %p39 = por %p37, %p38
      %p40 = scmp.ne.s32.totalorder %s29, %s30
      %p41 = scmp.eq.s32.totalorder %s21, 0
      %p42 = por %p40, %p41
      %p43 = scmp.ne.s32.totalorder %s29, %s30
      %p44 = scmp.eq.s32.totalorder %s22, 1
      %p45 = por %p43, %p44
      %p47 = scmp.ne.s32.totalorder %s30, %s46
      %p48 = scmp.eq.s32.totalorder %s22, 0
      %p49 = por %p47, %p48
      %s50 = ssub.s32 %s16, %s23
      %p51 = scmp.eq.s32.totalorder %s50, 0
      %s53 = sadd.s32 %s52, 1
      %s54 = scalar_select %p51, %s52, %s53
      %p57 = pneg %p51
      %p58 = scmp.eq.s32.totalorder %s16, 1
      %p59 = por %p57, %p58
      %p60 = scmp.ne.s32.totalorder %s52, %s55
      %p61 = scmp.eq.s32.totalorder %s16, 0
      %p62 = por %p60, %p61
      %p63 = scmp.ne.s32.totalorder %s52, %s55
      %p64 = scmp.eq.s32.totalorder %s21, 1
      %p65 = por %p63, %p64
      %p66 = scmp.ne.s32.totalorder %s55, %s56
      %p67 = scmp.eq.s32.totalorder %s21, 0
      %p68 = por %p66, %p67
      %p69 = scmp.ne.s32.totalorder %s55, %s56
      %p70 = scmp.eq.s32.totalorder %s22, 1
      %p71 = por %p69, %p70
      %p73 = scmp.ne.s32.totalorder %s56, %s72
      %p74 = scmp.eq.s32.totalorder %s22, 0
      %p75 = por %p73, %p74
      %s77 = sadd.s32 %s76, 1
      %p80 = scmp.eq.s32.totalorder %s16, 1
      %p81 = scmp.ne.s32.totalorder %s76, %s78
      %p82 = scmp.eq.s32.totalorder %s16, 0
      %p83 = por %p81, %p82
      %p84 = scmp.ne.s32.totalorder %s76, %s78
      %p85 = scmp.eq.s32.totalorder %s21, 1
      %p86 = por %p84, %p85
      %p87 = scmp.ne.s32.totalorder %s78, %s79
      %p88 = scmp.eq.s32.totalorder %s21, 0
      %p89 = por %p87, %p88
      %p90 = scmp.ne.s32.totalorder %s78, %s79
      %p91 = scmp.eq.s32.totalorder %s22, 1
      %p92 = por %p90, %p91
      %p94 = scmp.ne.s32.totalorder %s79, %s93
      %p95 = scmp.eq.s32.totalorder %s22, 0
      %p96 = por %p94, %p95
      %s98 = sadd.s32 %s97, 1
      %p101 = scmp.eq.s32.totalorder %s16, 1
      %p102 = scmp.ne.s32.totalorder %s97, %s99
      %p103 = scmp.eq.s32.totalorder %s16, 0
      %p104 = por %p102, %p103
      %p105 = scmp.ne.s32.totalorder %s97, %s99
      %p106 = scmp.eq.s32.totalorder %s21, 1
      %p107 = por %p105, %p106
      %p108 = scmp.ne.s32.totalorder %s99, %s100
      %p109 = scmp.eq.s32.totalorder %s21, 0
      %p110 = por %p108, %p109
      %p111 = scmp.ne.s32.totalorder %s99, %s100
      %p112 = scmp.eq.s32.totalorder %s22, 1
      %p113 = por %p111, %p112
      %p115 = scmp.ne.s32.totalorder %s100, %s114
      %p116 = scmp.eq.s32.totalorder %s22, 0
      %p117 = por %p115, %p116
      %s119 = sadd.s32 %s118, 1
      %p122 = scmp.eq.s32.totalorder %s16, 1
      %p123 = scmp.ne.s32.totalorder %s118, %s120
      %p124 = scmp.eq.s32.totalorder %s16, 0
      %p125 = por %p123, %p124
      %p126 = scmp.ne.s32.totalorder %s118, %s120
      %p127 = scmp.eq.s32.totalorder %s21, 1
      %p128 = por %p126, %p127
      %p129 = scmp.ne.s32.totalorder %s120, %s121
      %p130 = scmp.eq.s32.totalorder %s21, 0
      %p131 = por %p129, %p130
      %p132 = scmp.ne.s32.totalorder %s120, %s121
      %p133 = scmp.eq.s32.totalorder %s22, 1
      %p134 = por %p132, %p133
      %p136 = scmp.ne.s32.totalorder %s121, %s135
      %p137 = scmp.eq.s32.totalorder %s22, 0
      %p138 = por %p136, %p137
      %s140 = sadd.s32 %s139, 1
      %p143 = scmp.eq.s32.totalorder %s16, 1
      %p144 = scmp.ne.s32.totalorder %s139, %s141
      %p145 = scmp.eq.s32.totalorder %s16, 0
      %p146 = por %p144, %p145
      %p147 = scmp.ne.s32.totalorder %s139, %s141
      %p148 = scmp.eq.s32.totalorder %s21, 1
      %p149 = por %p147, %p148
      %p150 = scmp.ne.s32.totalorder %s141, %s142
      %p151 = scmp.eq.s32.totalorder %s21, 0
      %p152 = por %p150, %p151
      %p153 = scmp.ne.s32.totalorder %s141, %s142
      %p154 = scmp.eq.s32.totalorder %s22, 1
      %p155 = por %p153, %p154
      %p157 = scmp.ne.s32.totalorder %s142, %s156
      %p158 = scmp.eq.s32.totalorder %s22, 0
      %p159 = por %p157, %p158
      %s161 = sadd.s32 %s160, 1
      %p164 = scmp.eq.s32.totalorder %s16, 1
      %p165 = scmp.ne.s32.totalorder %s160, %s162
      %p166 = scmp.eq.s32.totalorder %s16, 0
      %p167 = por %p165, %p166
      %p168 = scmp.ne.s32.totalorder %s160, %s162
      %p169 = scmp.eq.s32.totalorder %s21, 1
      %p170 = por %p168, %p169
      %p171 = scmp.ne.s32.totalorder %s162, %s163
      %p172 = scmp.eq.s32.totalorder %s21, 0
      %p173 = por %p171, %p172
      %p174 = scmp.ne.s32.totalorder %s162, %s163
      %p175 = scmp.eq.s32.totalorder %s22, 1
      %p176 = por %p174, %p175
      %p178 = scmp.ne.s32.totalorder %s163, %s177
      %p179 = scmp.eq.s32.totalorder %s22, 0
      %p180 = por %p178, %p179
      %s181 = ssub.s32 %s16, %s23
      %p182 = scmp.eq.s32.totalorder %s181, 0
      %s184 = sadd.s32 %s183, 1
      %s185 = scalar_select %p182, %s183, %s184
      %p188 = pneg %p182
      %p189 = scmp.eq.s32.totalorder %s16, 1
      %p190 = por %p188, %p189
      %p191 = scmp.ne.s32.totalorder %s183, %s186
      %p192 = scmp.eq.s32.totalorder %s16, 0
      %p193 = por %p191, %p192
      %p194 = scmp.ne.s32.totalorder %s183, %s186
      %p195 = scmp.eq.s32.totalorder %s21, 1
      %p196 = por %p194, %p195
      %p197 = scmp.ne.s32.totalorder %s186, %s187
      %p198 = scmp.eq.s32.totalorder %s21, 0
      %p199 = por %p197, %p198
      %p200 = scmp.ne.s32.totalorder %s186, %s187
      %p201 = scmp.eq.s32.totalorder %s22, 1
      %p202 = por %p200, %p201
      %p204 = scmp.ne.s32.totalorder %s187, %s203
      %p205 = scmp.eq.s32.totalorder %s22, 0
      %p206 = por %p204, %p205
      %p207 = scmp.le.s32.totalorder 1, %s16
      %p208 = scmp.lt.s32.totalorder %s16, 3
      %p209 = pnand %p207, %p208
      %p210 = pneg %p209
      // Predicated region
      $region9: #{tpu_custom_call.1} parent=5 // pred_check
        _
      $region10: #{tpu_custom_call.1} parent=5 // pred_check_branch
        %212 = sbr.rel (%p209) target = $region12
      $region11: #{tpu_custom_call.1} parent=5 // pred_region
        %s213 = ssub.s32 %s16, 1
        // Predicated region
        $region13: #{tpu_custom_call.1} parent=11 // pred_check
          %p214 = pneg %p89
        $region14: #{tpu_custom_call.1} parent=11 // pred_check_branch
          %216 = sbr.rel (%p214) target = $region16
        $region15: #{tpu_custom_call.1} parent=11 // pred_region
          _
        $region16: #{tpu_custom_call.1} parent=11 // pred_fallthru
          _
        // Predicated region
        $region17: #{tpu_custom_call.1} parent=11 // pred_check
          %p217 = pneg %p110
        $region18: #{tpu_custom_call.1} parent=11 // pred_check_branch
          %219 = sbr.rel (%p217) target = $region20
        $region19: #{tpu_custom_call.1} parent=11 // pred_region
          _
        $region20: #{tpu_custom_call.1} parent=11 // pred_fallthru
          _
        // Predicated region
        $region21: #{tpu_custom_call.1} parent=11 // pred_check
          %p220 = pneg %p131
        $region22: #{tpu_custom_call.1} parent=11 // pred_check_branch
          %222 = sbr.rel (%p220) target = $region24
        $region23: #{tpu_custom_call.1} parent=11 // pred_region
          _
        $region24: #{tpu_custom_call.1} parent=11 // pred_fallthru
          _
        // Predicated region
        $region25: #{tpu_custom_call.1} parent=11 // pred_check
          %p223 = pneg %p152
        $region26: #{tpu_custom_call.1} parent=11 // pred_check_branch
          %225 = sbr.rel (%p223) target = $region28
        $region27: #{tpu_custom_call.1} parent=11 // pred_region
          _
        $region28: #{tpu_custom_call.1} parent=11 // pred_fallthru
          _
        // Predicated region
        $region29: #{tpu_custom_call.1} parent=11 // pred_check
          %p226 = pneg %p173
        $region30: #{tpu_custom_call.1} parent=11 // pred_check_branch
          %228 = sbr.rel (%p226) target = $region32
        $region31: #{tpu_custom_call.1} parent=11 // pred_region
          _
        $region32: #{tpu_custom_call.1} parent=11 // pred_fallthru
          _
      $region12: #{tpu_custom_call.1} parent=5 // pred_fallthru
        _
      %p229 = scmp.lt.s32.totalorder %s16, 2
      // Predicated region
      $region33: #{tpu_custom_call.1} parent=5 // pred_check
        %p230 = pneg %p229
      $region34: #{tpu_custom_call.1} parent=5 // pred_check_branch
        %232 = sbr.rel (%p230) target = $region36
      $region35: #{tpu_custom_call.1} parent=5 // pred_region
        // Predicated region
        $region37: #{tpu_custom_call.1} parent=35 // pred_check
          %p233 = pneg %p36
        $region38: #{tpu_custom_call.1} parent=35 // pred_check_branch
          %235 = sbr.rel (%p233) target = $region40
        $region39: #{tpu_custom_call.1} parent=35 // pred_region
          %s236 = smul.u32 8, %s16
          %p237 = scmp.lt.s32.totalorder %s236, 15
          %s238 = scalar_select %p237, %s236, 15
          %s239 = smul.addr %s238, 8
          %s240 = scalar_lea.vmem %s0, %s239
          %s241 = smul.u32 8, %s16
        $region40: #{tpu_custom_call.1} parent=35 // pred_fallthru
          _
        // Predicated region
        $region41: #{tpu_custom_call.1} parent=35 // pred_check
          %p242 = pneg %p62
        $region42: #{tpu_custom_call.1} parent=35 // pred_check_branch
          %244 = sbr.rel (%p242) target = $region44
        $region43: #{tpu_custom_call.1} parent=35 // pred_region
          %s245 = smul.u32 8, %s16
          %p246 = scmp.lt.s32.totalorder %s245, 15
          %s247 = scalar_select %p246, %s245, 15
          %s248 = smul.addr %s247, 8
          %s249 = scalar_lea.vmem %s1, %s248
          %s250 = smul.u32 8, %s16
        $region44: #{tpu_custom_call.1} parent=35 // pred_fallthru
          _
      $region36: #{tpu_custom_call.1} parent=5 // pred_fallthru
        _
      %p251 = scmp.le.s32.totalorder 1, %s16
      %p252 = scmp.lt.s32.totalorder %s16, 3
      %p253 = pnand %p251, %p252
      %p254 = pneg %p253
      // Predicated region
      $region45: #{tpu_custom_call.1} parent=5 // pred_check
        _
      $region46: #{tpu_custom_call.1} parent=5 // pred_check_branch
        %256 = sbr.rel (%p253) target = $region48
      $region47: #{tpu_custom_call.1} parent=5 // pred_region
        %s257 = ssub.s32 %s16, 1
        %s258 = smul.u32 8, %s21
        %p259 = scmp.lt.s32.totalorder %s258, 15
        %s260 = scalar_select %p259, %s258, 15
        %s261 = smul.addr %s260, 8
        %s262 = scalar_lea.vmem %s0, %s261
        %p263 = pneg %p42
        %p264 = pneg %p39
        %s265 = smul.u32 8, %s21
        %p266 = scmp.lt.s32.totalorder %s265, 15
        %s267 = scalar_select %p266, %s265, 15
        %s268 = smul.addr %s267, 8
        %s269 = scalar_lea.vmem %s1, %s268
        %p270 = pneg %p68
        %p271 = pneg %p65
        %p272 = pneg %p89
        %p273 = pneg %p86
        %p274 = pneg %p110
        %p275 = pneg %p107
        %p276 = pneg %p131
        %p277 = pneg %p128
        %p278 = pneg %p152
        %p279 = pneg %p149
        %p280 = pneg %p173
        %p281 = pneg %p170
        %p282 = pneg %p199
        %p283 = pneg %p196
        %s284 = sand.u32 %s186, 1
        %s285 = scalar_lea.sflag [#allocation3], %s284
        %s286 = sand.u32 %s186, 1
        %s287 = smul.addr %s286, 64
        %s288 = scalar_lea.vmem [#allocation2], %s287
        %s289 = smul.u32 8, %s21
        %p290 = scmp.lt.s32.totalorder %s289, 15
        %s291 = scalar_select %p290, %s289, 15
        %s292 = smul.addr %s291, 8
        %s293 = scalar_lea.vmem %s0, %s292
        %s294 = smul.u32 8, %s21
        %s295 = smul.u32 8, %s21
        %p296 = scmp.lt.s32.totalorder %s295, 15
        %s297 = scalar_select %p296, %s295, 15
        %s298 = smul.addr %s297, 8
        %s299 = scalar_lea.vmem %s1, %s298
        %s300 = smul.u32 8, %s21
        %s301 = smul.u32 8, %s21
        %v303 = vld [vmem:[%s293] sm:$0xff]
        %v304 = vld [vmem:[%s293 + $0x8] sm:$0xff]
        %v305 = vld [vmem:[%s293 + $0x10] sm:$0xff]
        %v306 = vld [vmem:[%s293 + $0x18] sm:$0xff]
        %v307 = vld [vmem:[%s293 + $0x20] sm:$0xff]
        %v308 = vld [vmem:[%s293 + $0x28] sm:$0xff]
        %v309 = vld [vmem:[%s293 + $0x30] sm:$0xff]
        %v310 = vld [vmem:[%s293 + $0x38] sm:$0xff]
        %v311 = vld [vmem:[%s299] sm:$0xff]
        %v312 = vld [vmem:[%s299 + $0x8] sm:$0xff]
        %v313 = vld [vmem:[%s299 + $0x10] sm:$0xff]
        %v314 = vld [vmem:[%s299 + $0x18] sm:$0xff]
        %v315 = vld [vmem:[%s299 + $0x20] sm:$0xff]
        %v316 = vld [vmem:[%s299 + $0x28] sm:$0xff]
        %v317 = vld [vmem:[%s299 + $0x30] sm:$0xff]
        %v318 = vld [vmem:[%s299 + $0x38] sm:$0xff]
        %vm319 = vcmask 261120
        %v320 = vsel %vm319, %v303, 0.0
        %321 = vadd.xlane.f32.xlu0 %v320
        %v322 = vpop.xlane.xlu0 %321
        %v323 = vsel %vm319, %v304, 0.0
        %324 = vadd.xlane.f32.xlu0 %v323
        %v325 = vpop.xlane.xlu0 %324
        %v326 = vsel %vm319, %v305, 0.0
        %327 = vadd.xlane.f32.xlu0 %v326
        %v328 = vpop.xlane.xlu0 %327
        %v329 = vsel %vm319, %v306, 0.0
        %330 = vadd.xlane.f32.xlu0 %v329
        %v331 = vpop.xlane.xlu0 %330
        %v332 = vsel %vm319, %v307, 0.0
        %333 = vadd.xlane.f32.xlu0 %v332
        %v334 = vpop.xlane.xlu0 %333
        %v335 = vsel %vm319, %v308, 0.0
        %336 = vadd.xlane.f32.xlu0 %v335
        %v337 = vpop.xlane.xlu0 %336
        %v338 = vsel %vm319, %v309, 0.0
        %339 = vadd.xlane.f32.xlu0 %v338
        %v340 = vpop.xlane.xlu0 %339
        %v341 = vsel %vm319, %v310, 0.0
        %342 = vadd.xlane.f32.xlu0 %v341
        %v343 = vpop.xlane.xlu0 %342
        %v344 = vrcp.pop 32.0
        %v345 = vmul.f32 %v322, %v344
        %v346 = vmul.f32 %v325, %v344
        %v347 = vmul.f32 %v328, %v344
        %v348 = vmul.f32 %v331, %v344
        %v349 = vmul.f32 %v334, %v344
        %v350 = vmul.f32 %v337, %v344
        %v351 = vmul.f32 %v340, %v344
        %v352 = vmul.f32 %v343, %v344
        %v353 = vsel %vm319, %v311, 0.0
        %354 = vadd.xlane.f32.xlu0 %v353
        %v355 = vpop.xlane.xlu0 %354
        %v356 = vsel %vm319, %v312, 0.0
        %357 = vadd.xlane.f32.xlu0 %v356
        %v358 = vpop.xlane.xlu0 %357
        %v359 = vsel %vm319, %v313, 0.0
        %360 = vadd.xlane.f32.xlu0 %v359
        %v361 = vpop.xlane.xlu0 %360
        %v362 = vsel %vm319, %v314, 0.0
        %363 = vadd.xlane.f32.xlu0 %v362
        %v364 = vpop.xlane.xlu0 %363
        %v365 = vsel %vm319, %v315, 0.0
        %366 = vadd.xlane.f32.xlu0 %v365
        %v367 = vpop.xlane.xlu0 %366
        %v368 = vsel %vm319, %v316, 0.0
        %369 = vadd.xlane.f32.xlu0 %v368
        %v370 = vpop.xlane.xlu0 %369
        %v371 = vsel %vm319, %v317, 0.0
        %372 = vadd.xlane.f32.xlu0 %v371
        %v373 = vpop.xlane.xlu0 %372
        %v374 = vsel %vm319, %v318, 0.0
        %375 = vadd.xlane.f32.xlu0 %v374
        %v376 = vpop.xlane.xlu0 %375
        %v377 = vmul.f32 %v355, %v344
        %v378 = vmul.f32 %v358, %v344
        %v379 = vmul.f32 %v361, %v344
        %v380 = vmul.f32 %v364, %v344
        %v381 = vmul.f32 %v367, %v344
        %v382 = vmul.f32 %v370, %v344
        %v383 = vmul.f32 %v373, %v344
        %v384 = vmul.f32 %v376, %v344
        %v385 = vsub.f32 %v303, %v345
        %v386 = vsub.f32 %v304, %v346
        %v387 = vsub.f32 %v305, %v347
        %v388 = vsub.f32 %v306, %v348
        %v389 = vsub.f32 %v307, %v349
        %v390 = vsub.f32 %v308, %v350
        %v391 = vsub.f32 %v309, %v351
        %v392 = vsub.f32 %v310, %v352
        %v393 = vsub.f32 %v311, %v377
        %v394 = vsub.f32 %v312, %v378
        %v395 = vsub.f32 %v313, %v379
        %v396 = vsub.f32 %v314, %v380
        %v397 = vsub.f32 %v315, %v381
        %v398 = vsub.f32 %v316, %v382
        %v399 = vsub.f32 %v317, %v383
        %v400 = vsub.f32 %v318, %v384
        %v401 = vmul.f32 %v385, %v385
        %v402 = vmul.f32 %v386, %v386
        %v403 = vmul.f32 %v387, %v387
        %v404 = vmul.f32 %v388, %v388
        %v405 = vmul.f32 %v389, %v389
        %v406 = vmul.f32 %v390, %v390
        %v407 = vmul.f32 %v391, %v391
        %v408 = vmul.f32 %v392, %v392
        %v409 = vmul.f32 %v393, %v393
        %v410 = vmul.f32 %v394, %v394
        %v411 = vmul.f32 %v395, %v395
        %v412 = vmul.f32 %v396, %v396
        %v413 = vmul.f32 %v397, %v397
        %v414 = vmul.f32 %v398, %v398
        %v415 = vmul.f32 %v399, %v399
        %v416 = vmul.f32 %v400, %v400
        %v417 = vadd.f32 %v401, %v409
        %v418 = vadd.f32 %v402, %v410
        %v419 = vadd.f32 %v403, %v411
        %v420 = vadd.f32 %v404, %v412
        %v421 = vadd.f32 %v405, %v413
        %v422 = vadd.f32 %v406, %v414
        %v423 = vadd.f32 %v407, %v415
        %v424 = vadd.f32 %v408, %v416
        %v425 = vsel %vm319, %v417, 0.0
        %426 = vadd.xlane.f32.xlu0 %v425
        %v427 = vpop.xlane.xlu0 %426
        %v428 = vsel %vm319, %v418, 0.0
        %429 = vadd.xlane.f32.xlu0 %v428
        %v430 = vpop.xlane.xlu0 %429
        %v431 = vsel %vm319, %v419, 0.0
        %432 = vadd.xlane.f32.xlu0 %v431
        %v433 = vpop.xlane.xlu0 %432
        %v434 = vsel %vm319, %v420, 0.0
        %435 = vadd.xlane.f32.xlu0 %v434
        %v436 = vpop.xlane.xlu0 %435
        %v437 = vsel %vm319, %v421, 0.0
        %438 = vadd.xlane.f32.xlu0 %v437
        %v439 = vpop.xlane.xlu0 %438
        %v440 = vsel %vm319, %v422, 0.0
        %441 = vadd.xlane.f32.xlu0 %v440
        %v442 = vpop.xlane.xlu0 %441
        %v443 = vsel %vm319, %v423, 0.0
        %444 = vadd.xlane.f32.xlu0 %v443
        %v445 = vpop.xlane.xlu0 %444
        %v446 = vsel %vm319, %v424, 0.0
        %447 = vadd.xlane.f32.xlu0 %v446
        %v448 = vpop.xlane.xlu0 %447
        %v449 = vmul.f32 %v427, %v344
        %v450 = vmul.f32 %v430, %v344
        %v451 = vmul.f32 %v433, %v344
        %v452 = vmul.f32 %v436, %v344
        %v453 = vmul.f32 %v439, %v344
        %v454 = vmul.f32 %v442, %v344
        %v455 = vmul.f32 %v445, %v344
        %v456 = vmul.f32 %v448, %v344
        %v457 = vadd.f32 %v449, 1e-05
        %v458 = vadd.f32 %v450, 1e-05
        %v459 = vadd.f32 %v451, 1e-05
        %v460 = vadd.f32 %v452, 1e-05
        %v461 = vadd.f32 %v453, 1e-05
        %v462 = vadd.f32 %v454, 1e-05
        %v463 = vadd.f32 %v455, 1e-05
        %v464 = vadd.f32 %v456, 1e-05
        %v465 = vrsqrt.pop %v457
        %v466 = vrsqrt.pop %v458
        %v467 = vrsqrt.pop %v459
        %v468 = vrsqrt.pop %v460
        %v469 = vrsqrt.pop %v461
        %v470 = vrsqrt.pop %v462
        %v471 = vrsqrt.pop %v463
        %v472 = vrsqrt.pop %v464
        %v473 = vmul.f32 %v385, %v465
        %v474 = vmul.f32 %v386, %v466
        %v475 = vmul.f32 %v387, %v467
        %v476 = vmul.f32 %v388, %v468
        %v477 = vmul.f32 %v389, %v469
        %v478 = vmul.f32 %v390, %v470
        %v479 = vmul.f32 %v391, %v471
        %v480 = vmul.f32 %v392, %v472
        %v481 = vmul.f32 %v393, %v465
        %v482 = vmul.f32 %v394, %v466
        %v483 = vmul.f32 %v395, %v467
        %v484 = vmul.f32 %v396, %v468
        %v485 = vmul.f32 %v397, %v469
        %v486 = vmul.f32 %v398, %v470
        %v487 = vmul.f32 %v399, %v471
        %v488 = vmul.f32 %v400, %v472
        %v489 = vld [vmem:[%s2] sm:$0x1]
        %v490 = vld [vmem:[%s3] sm:$0x1]
        %v492 = vlaneseq
        %v493 = vshrl.u32 %v492, 7
        %v494 = vsub.s32 0, %v493
        %v495 = vrot.slane %v489, %v494
        %v497 = vmul.f32 %v495, %v473
        %v498 = vmul.f32 %v495, %v474
        %v499 = vmul.f32 %v495, %v475
        %v500 = vmul.f32 %v495, %v476
        %v501 = vmul.f32 %v495, %v477
        %v502 = vmul.f32 %v495, %v478
        %v503 = vmul.f32 %v495, %v479
        %v504 = vmul.f32 %v495, %v480
        %v506 = vlaneseq
        %v507 = vshrl.u32 %v506, 7
        %v508 = vsub.s32 0, %v507
        %v509 = vrot.slane %v490, %v508
        %v511 = vmul.f32 %v509, %v481
        %v512 = vmul.f32 %v509, %v482
        %v513 = vmul.f32 %v509, %v483
        %v514 = vmul.f32 %v509, %v484
        %v515 = vmul.f32 %v509, %v485
        %v516 = vmul.f32 %v509, %v486
        %v517 = vmul.f32 %v509, %v487
        %v518 = vmul.f32 %v509, %v488
        %v519 = vsub.f32 %v497, %v511
        %v520 = vsub.f32 %v498, %v512
        %v521 = vsub.f32 %v499, %v513
        %v522 = vsub.f32 %v500, %v514
        %v523 = vsub.f32 %v501, %v515
        %v524 = vsub.f32 %v502, %v516
        %v525 = vsub.f32 %v503, %v517
        %v526 = vsub.f32 %v504, %v518
        %v527 = vld [vmem:[%s4] sm:$0x1]
        %v529 = vlaneseq
        %v530 = vshrl.u32 %v529, 7
        %v531 = vsub.s32 0, %v530
        %v532 = vrot.slane %v527, %v531
        %v534 = vadd.f32 %v519, %v532
        %v535 = vadd.f32 %v520, %v532
        %v536 = vadd.f32 %v521, %v532
        %v537 = vadd.f32 %v522, %v532
        %v538 = vadd.f32 %v523, %v532
        %v539 = vadd.f32 %v524, %v532
        %v540 = vadd.f32 %v525, %v532
        %v541 = vadd.f32 %v526, %v532
        %v542 = vmul.f32 %v495, %v481
        %v543 = vmul.f32 %v495, %v482
        %v544 = vmul.f32 %v495, %v483
        %v545 = vmul.f32 %v495, %v484
        %v546 = vmul.f32 %v495, %v485
        %v547 = vmul.f32 %v495, %v486
        %v548 = vmul.f32 %v495, %v487
        %v549 = vmul.f32 %v495, %v488
        %v550 = vmul.f32 %v509, %v473
        %v551 = vmul.f32 %v509, %v474
        %v552 = vmul.f32 %v509, %v475
        %v553 = vmul.f32 %v509, %v476
        %v554 = vmul.f32 %v509, %v477
        %v555 = vmul.f32 %v509, %v478
        %v556 = vmul.f32 %v509, %v479
        %v557 = vmul.f32 %v509, %v480
        %v558 = vadd.f32 %v542, %v550
        %v559 = vadd.f32 %v543, %v551
        %v560 = vadd.f32 %v544, %v552
        %v561 = vadd.f32 %v545, %v553
        %v562 = vadd.f32 %v546, %v554
        %v563 = vadd.f32 %v547, %v555
        %v564 = vadd.f32 %v548, %v556
        %v565 = vadd.f32 %v549, %v557
        %v566 = vld [vmem:[%s5] sm:$0x1]
        %v568 = vlaneseq
        %v569 = vshrl.u32 %v568, 7
        %v570 = vsub.s32 0, %v569
        %v571 = vrot.slane %v566, %v570
        %v573 = vadd.f32 %v558, %v571
        %v574 = vadd.f32 %v559, %v571
        %v575 = vadd.f32 %v560, %v571
        %v576 = vadd.f32 %v561, %v571
        %v577 = vadd.f32 %v562, %v571
        %v578 = vadd.f32 %v563, %v571
        %v579 = vadd.f32 %v564, %v571
        %v580 = vadd.f32 %v565, %v571
        %589 = vrot.lane.b32.xlu0 %v573, 32
        %v590 = vpop.permute.xlu0 %589
        %591 = vrot.lane.b32.xlu0 %v574, 32
        %v592 = vpop.permute.xlu0 %591
        %593 = vrot.lane.b32.xlu0 %v575, 32
        %v594 = vpop.permute.xlu0 %593
        %595 = vrot.lane.b32.xlu0 %v576, 32
        %v596 = vpop.permute.xlu0 %595
        %597 = vrot.lane.b32.xlu0 %v577, 32
        %v598 = vpop.permute.xlu0 %597
        %599 = vrot.lane.b32.xlu0 %v578, 32
        %v600 = vpop.permute.xlu0 %599
        %601 = vrot.lane.b32.xlu0 %v579, 32
        %v602 = vpop.permute.xlu0 %601
        %603 = vrot.lane.b32.xlu0 %v580, 32
        %v604 = vpop.permute.xlu0 %603
        %v613 = vsel %vm319, %v534, %v590
        %v614 = vsel %vm319, %v535, %v592
        %v615 = vsel %vm319, %v536, %v594
        %v616 = vsel %vm319, %v537, %v596
        %v617 = vsel %vm319, %v538, %v598
        %v618 = vsel %vm319, %v539, %v600
        %v619 = vsel %vm319, %v540, %v602
        %v620 = vsel %vm319, %v541, %v604
        %v621 = vpack.c.bf16 %v614, %v613
        %v622 = vpack.c.bf16 %v616, %v615
        %v623 = vpack.c.bf16 %v618, %v617
        %v624 = vpack.c.bf16 %v620, %v619
        %v625 = vld [vmem:[%s6] sm:$0xf]
        %v626 = vld [vmem:[%s6 + $0x4] sm:$0xf]
        %v627 = vld [vmem:[%s6 + $0x8] sm:$0xf]
        %v628 = vld [vmem:[%s6 + $0xc] sm:$0xf]
        %v629 = vld [vmem:[%s6 + $0x10] sm:$0xf]
        %v630 = vld [vmem:[%s6 + $0x14] sm:$0xf]
        %v631 = vld [vmem:[%s6 + $0x18] sm:$0xf]
        %v632 = vld [vmem:[%s6 + $0x1c] sm:$0xf]
        %v641 = vunpack.c.l.b16 %v625
        %v642 = vunpack.c.l.b16 %v626
        %v643 = vunpack.c.l.b16 %v627
        %v644 = vunpack.c.l.b16 %v628
        %v645 = vunpack.c.l.b16 %v629
        %v646 = vunpack.c.l.b16 %v630
        %v647 = vunpack.c.l.b16 %v631
        %v648 = vunpack.c.l.b16 %v632
        %v649 = vpack.c.b16 %v642, %v641
        %v650 = vpack.c.b16 %v644, %v643
        %v651 = vpack.c.b16 %v646, %v645
        %v652 = vpack.c.b16 %v648, %v647
        %vm657 = vcmask 523264
        %v659 = vsel %vm657, %v621, 0
        %v662 = vsel %vm657, %v622, 0
        %v665 = vsel %vm657, %v623, 0
        %v668 = vsel %vm657, %v624, 0
        %670 = vmatprep.subr.bf16.mxu0 0
        %671 = vmatpush1.bf16.msra.mxu0 0
        %672 = vmatprep.subr.bf16.mxu0 0
        %673 = vmatpush1.bf16.msra.mxu0 0
        %674 = vmatprep.subr.bf16.mxu0 0
        %675 = vmatpush1.bf16.msra.mxu0 0
        %676 = vmatprep.subr.bf16.mxu0 0
        %677 = vmatpush1.bf16.msra.mxu0 0
        %678 = vmatprep.subr.bf16.mxu0 0
        %679 = vmatpush1.bf16.msra.mxu0 %v652
        %680 = vmatprep.subr.bf16.mxu0 0
        %681 = vmatpush1.bf16.msra.mxu0 %v651
        %682 = vmatprep.subr.bf16.mxu0 0
        %683 = vmatpush1.bf16.msra.mxu0 %v650
        %684 = vmatprep.subr.bf16.mxu0 0
        %685 = vmatpush1.bf16.msra.mxu0 %v649
        %686 = vmatprep.subr.bf16.mxu0 0
        %687 = vmatpush2.bf16.msra.mxu0 0
        %688 = vmatprep.subr.bf16.mxu0 0
        %689 = vmatpush2.bf16.msra.mxu0 0
        %690 = vmatprep.subr.bf16.mxu0 0
        %691 = vmatpush2.bf16.msra.mxu0 0
        %692 = vmatprep.subr.bf16.mxu0 0
        %693 = vmatpush2.bf16.msra.mxu0 0
        %694 = vmatprep.subr.bf16.mxu0 0
        %695 = vmatpush2.bf16.msra.mxu0 0
        %696 = vmatprep.subr.bf16.mxu0 0
        %697 = vmatpush2.bf16.msra.mxu0 0
        %698 = vmatprep.subr.bf16.mxu0 0
        %699 = vmatpush2.bf16.msra.mxu0 0
        %700 = vmatprep.subr.bf16.mxu0 0
        %701 = vmatpush2.bf16.msra.mxu0 0
        %702 = vmatprep.mubr.bf16.mxu0 0
        %703 = vmatmul.mubr.bf16.gmra.mxu0 %v659
        %v704 = vpop.f32.mrf.mxu0
        %v705 = vadd.f32 0.0, %v704
        %v706 = vpop.f32.mrf.mxu0
        %v707 = vpop.f32.mrf.mxu0
        %v708 = vadd.f32 0.0, %v707
        %v709 = vpop.f32.mrf.mxu0
        %710 = vmatprep.mubr.bf16.mxu0 0
        %711 = vmatmul.mubr.bf16.gmra.mxu0 %v662
        %v712 = vpop.f32.mrf.mxu0
        %v713 = vadd.f32 0.0, %v712
        %v714 = vpop.f32.mrf.mxu0
        %v715 = vpop.f32.mrf.mxu0
        %v716 = vadd.f32 0.0, %v715
        %v717 = vpop.f32.mrf.mxu0
        %718 = vmatprep.mubr.bf16.mxu0 0
        %719 = vmatmul.mubr.bf16.gmra.mxu0 %v665
        %v720 = vpop.f32.mrf.mxu0
        %v721 = vadd.f32 0.0, %v720
        %v722 = vpop.f32.mrf.mxu0
        %v723 = vpop.f32.mrf.mxu0
        %v724 = vadd.f32 0.0, %v723
        %v725 = vpop.f32.mrf.mxu0
        %726 = vmatprep.mubr.bf16.mxu0 0
        %727 = vmatmul.mubr.bf16.gmra.mxu0 %v668
        %v728 = vpop.f32.mrf.mxu0
        %v729 = vadd.f32 0.0, %v728
        %v730 = vpop.f32.mrf.mxu0
        %v731 = vpop.f32.mrf.mxu0
        %v732 = vadd.f32 0.0, %v731
        %v733 = vpop.f32.mrf.mxu0
        %734 = vdwg.mxu0
        %735 = vst [vmem:[%s288] sm:$0xff] %v705
        %736 = vst [vmem:[%s288 + $0x8] sm:$0xff] %v708
        %737 = vst [vmem:[%s288 + $0x10] sm:$0xff] %v713
        %738 = vst [vmem:[%s288 + $0x18] sm:$0xff] %v716
        %739 = vst [vmem:[%s288 + $0x20] sm:$0xff] %v721
        %740 = vst [vmem:[%s288 + $0x28] sm:$0xff] %v724
        %741 = vst [vmem:[%s288 + $0x30] sm:$0xff] %v729
        %742 = vst [vmem:[%s288 + $0x38] sm:$0xff] %v732
        %s743 = sand.u32 %s186, 1
        %s744 = scalar_lea.sflag [#allocation3], %s743
        %s745 = sand.u32 %s186, 1
        %s746 = smul.addr %s745, 64
        %s747 = scalar_lea.vmem [#allocation2], %s746
        // Predicated region
        $region49: #{tpu_custom_call.1} parent=47 // pred_check
          %p748 = pneg %p196
        $region50: #{tpu_custom_call.1} parent=47 // pred_check_branch
          %750 = sbr.rel (%p748) target = $region52
        $region51: #{tpu_custom_call.1} parent=47 // pred_region
          %s751 = smul.u32 8, %s21
          %s753 = ssub.s32 1024, 1024
          %754 = vsyncadd %s744, %s753
          %s755 = smul.addr %s751, 128
          %s756 = scalar_lea.hbm %s7, %s755
          %s757 = sshll.u32 %s747, 4
          %s758 = int_to_ptr.vmem [resolvable:$true] %s757
          %763 = dma.vmem_to_hbm [thread:$0]  %s758, 1024, %s756, %s744, 128, 128, 8
        $region52: #{tpu_custom_call.1} parent=47 // pred_fallthru
          _
      $region48: #{tpu_custom_call.1} parent=5 // pred_fallthru
        _
      %p764 = scmp.le.s32.totalorder 2, %s16
      // Predicated region
      $region53: #{tpu_custom_call.1} parent=5 // pred_check
        %p765 = pneg %p764
      $region54: #{tpu_custom_call.1} parent=5 // pred_check_branch
        %767 = sbr.rel (%p765) target = $region56
      $region55: #{tpu_custom_call.1} parent=5 // pred_region
        %s768 = ssub.s32 %s16, 2
        // Predicated region
        $region57: #{tpu_custom_call.1} parent=55 // pred_check
          %p769 = pneg %p202
        $region58: #{tpu_custom_call.1} parent=55 // pred_check_branch
          %771 = sbr.rel (%p769) target = $region60
        $region59: #{tpu_custom_call.1} parent=55 // pred_region
          %s772 = sand.u32 %s187, 1
          %s773 = scalar_lea.sflag [#allocation3], %s772
          %s774 = sand.u32 %s187, 1
          %s775 = smul.addr %s774, 64
          %s776 = scalar_lea.vmem [#allocation2], %s775
          %777 = dma.done %s773, 1024
        $region60: #{tpu_custom_call.1} parent=55 // pred_fallthru
          _
      $region56: #{tpu_custom_call.1} parent=5 // pred_fallthru
        _
    $region6: #{tpu_custom_call.1} parent=1 // loop_footer
      %s20 = sadd.s32 1, %s16
    $region7: #{tpu_custom_call.1} parent=1 // loop_footer_branch
      %15 = sbr.rel target = $region3
    $region8: #{tpu_custom_call.1} parent=1 // loop_exit
      _
    %778 = vsyncpa [#allocation3], 1
    %s779 = scalar_lea.sflag [#allocation3], 1
    %780 = vsyncpa %s779, 1

</llo_original>
